<compile_context>
chip_gen: v7x
topology: tpu7x:2x2x1
jax: 0.10.0
libtpu: 0.0.40
codegen_flags: <defaults>
</compile_context>

<pallas_src>
import functools

import jax
import jax.numpy as jnp
from jax import lax
from jax.experimental import pallas as pl
from jax.experimental.pallas import tpu as pltpu


# ---------------------------------------------------------------------------
# VMEM / tiling planners (generation-aware).
# ---------------------------------------------------------------------------
def _vmem_plan():
    """Return (vmem_limit_bytes, buffer_budget_bytes) for this TPU generation."""
    try:
        cap = int(pltpu.get_tpu_info().vmem_capacity_bytes)
    except Exception:            # conservative fallback that also fits v7x (64 MiB)
        cap = 64 * 1024 * 1024
    limit = max(32 * 1024 * 1024, min(cap - 8 * 1024 * 1024, int(cap * 0.75)))
    budget = int(limit * 0.7)    # what our explicit (double-)buffers may use
    return limit, budget


def _pick_batch_fold(n, *, max_fold=8, min_parallel_blocks=2):
    """Largest divisor of n (<= max_fold) that still leaves >= min_parallel_blocks
    grid blocks along the leading 'parallel' axis (keeps both v7x TCs fed)."""
    best = 1
    for f in range(1, min(max_fold, n) + 1):
        if n % f == 0 and n // f >= min_parallel_blocks:
            best = f
    return best


def _pick_hw_tile(hw_padded, *, per_t_bytes, fixed_bytes, budget_bytes, max_tile):
    """Largest multiple-of-128 divisor of hw_padded whose per-step working set
    (per_t_bytes * T + fixed_bytes) stays within budget_bytes (and <= max_tile)."""
    assert hw_padded % 128 == 0
    avail = max(budget_bytes - fixed_bytes, per_t_bytes * 128)
    cap = min(avail // max(per_t_bytes, 1), max_tile, hw_padded)
    cap = max(128, cap - cap % 128)
    t = int(cap)
    while hw_padded % t != 0:      # hw_padded % 128 == 0, so this terminates at 128
        t -= 128
    return t


# ---------------------------------------------------------------------------
# Kernel 1: fused avg+max spatial pooling, streamed over H*W in lane tiles.
# x block: (Nb, C, T); output block: (Nb, C, 2) with [..., 0]=mean, [..., 1]=max.
# ---------------------------------------------------------------------------
def _pool_kernel(x_ref, o_ref, sum_acc, max_acc, *, inv_hw):
    t = pl.program_id(1)

    @pl.when(t == 0)
    def _init():
        sum_acc[...] = jnp.zeros_like(sum_acc)
        max_acc[...] = jnp.full_like(max_acc, -jnp.inf)

    # Pure VPU loop body; bf16 input is upcast to f32 for accumulation.
    # (If a v5e profile ever shows this vst-bound, switch to a per-step XLU
    #  lane-reduce into a narrow accumulator — XLU slots are idle here.)
    chunk = x_ref[...].astype(jnp.float32)               # (Nb, C, T)
    sum_acc[...] += chunk
    max_acc[...] = jnp.maximum(max_acc[...], chunk)

    @pl.when(t == pl.num_programs(1) - 1)
    def _finalize():
        # One deferred cross-lane (XLU) reduce per statistic.
        s = jnp.sum(sum_acc[...], axis=-1, keepdims=True) * inv_hw   # (Nb, C, 1)
        m = jnp.max(max_acc[...], axis=-1, keepdims=True)            # (Nb, C, 1)
        lane = lax.broadcasted_iota(jnp.int32, o_ref.shape, o_ref.ndim - 1)
        o_ref[...] = jnp.where(lane == 0, s, m)                      # (Nb, C, 2)


def fused_avg_max_pool(x_flat, true_hw, *, max_hw_tile=8192):
    """x_flat: (N, C, HWp), zero-padded along HW to a multiple of 128.
    Returns (N, C, 2): [...,0]=mean over the *true* HW, [...,1]=max."""
    N, C, HWp = x_flat.shape
    vmem_limit, budget = _vmem_plan()
    nb = _pick_batch_fold(N)
    in_b = x_flat.dtype.itemsize
    # Per unit of T: double-buffered input + the two f32 accumulators — counting
    # the scratch here clamps T so it never blows the (v7x) VMEM budget.
    per_t = nb * C * (2 * in_b + 2 * 4)
    fixed = 2 * nb * C * 2 * 4
    T = _pick_hw_tile(HWp, per_t_bytes=per_t, fixed_bytes=fixed,
                      budget_bytes=budget, max_tile=max_hw_tile)
    n_t = HWp // T
    kernel = functools.partial(_pool_kernel, inv_hw=1.0 / float(true_hw))
    cost = pl.CostEstimate(
        flops=int(2 * N * C * HWp),
        transcendentals=0,
        bytes_accessed=int(N * C * HWp * in_b + N * C * 2 * 4))
    return pl.pallas_call(
        kernel,
        out_shape=jax.ShapeDtypeStruct((N, C, 2), jnp.float32),
        grid=(N // nb, n_t),
        in_specs=[pl.BlockSpec((nb, C, T), lambda n, t: (n, 0, t))],
        out_specs=pl.BlockSpec((nb, C, 2), lambda n, t: (n, 0, 0)),
        scratch_shapes=[
            pltpu.VMEM((nb, C, T), jnp.float32),   # running sum
            pltpu.VMEM((nb, C, T), jnp.float32),   # running max
        ],
        compiler_params=pltpu.CompilerParams(
            dimension_semantics=("parallel", "arbitrary"),
            vmem_limit_bytes=vmem_limit),
        cost_estimate=cost,
    )(x_flat)


# ---------------------------------------------------------------------------
# Kernel 2: fea_v[b, c, hw] = sum_m  w[b, c, m] * fea[b, m, c, hw]
# Weights are passed as (B, C, M) so the per-channel scale broadcasts across
# lanes without any in-kernel transpose.  Output block (Nb, C, T) is lane-dense.
# ---------------------------------------------------------------------------
def _combine_kernel(wt_ref, f_ref, o_ref):
    nb = f_ref.shape[0]
    n_branches = f_ref.shape[1]
    for n in range(nb):                                   # tiny static unroll
        wt = wt_ref[n]                                    # (C, M) f32
        acc = f_ref[n, 0].astype(jnp.float32) * wt[:, 0:1]
        for m in range(1, n_branches):
            acc = acc + f_ref[n, m].astype(jnp.float32) * wt[:, m:m + 1]
        o_ref[n] = acc.astype(o_ref.dtype)


def weighted_branch_sum(feas, weights, *, out_dtype=None, max_hw_tile=8192):
    """feas: (B, M, C, HWp), weights: (B, M, C) -> (B, C, HWp)."""
    B, M, C, HWp = feas.shape
    out_dtype = feas.dtype if out_dtype is None else out_dtype
    vmem_limit, budget = _vmem_plan()
    nb = _pick_batch_fold(B)
    in_b = feas.dtype.itemsize
    out_b = jnp.dtype(out_dtype).itemsize
    per_t = nb * C * (2 * M * in_b + 2 * out_b)           # double-buffered in + out
    fixed = 2 * nb * C * M * 4                            # weights block
    T = _pick_hw_tile(HWp, per_t_bytes=per_t, fixed_bytes=fixed,
                      budget_bytes=budget, max_tile=max_hw_tile)
    n_t = HWp // T
    wt = jnp.transpose(weights, (0, 2, 1)).astype(jnp.float32)   # (B, C, M)
    cost = pl.CostEstimate(
        flops=int(2 * B * M * C * HWp),
        transcendentals=0,
        bytes_accessed=int(B * M * C * HWp * in_b + B * C * HWp * out_b
                           + B * C * M * 4))
    return pl.pallas_call(
        _combine_kernel,
        out_shape=jax.ShapeDtypeStruct((B, C, HWp), out_dtype),
        grid=(B // nb, n_t),
        in_specs=[
            pl.BlockSpec((nb, C, M), lambda b, t: (b, 0, 0)),
            pl.BlockSpec((nb, M, C, T), lambda b, t: (b, 0, 0, t)),
        ],
        out_specs=pl.BlockSpec((nb, C, T), lambda b, t: (b, 0, t)),
        compiler_params=pltpu.CompilerParams(
            dimension_semantics=("parallel", "parallel"),
            vmem_limit_bytes=vmem_limit),
        cost_estimate=cost,
    )(wt, feas)


# ---------------------------------------------------------------------------
# Branch feature extractors (grouped KxK conv + BN + ReLU), shared by the
# Pallas path and the pure-JAX reference.  bf16 epilogue: both Pallas kernels
# are pure HBM streamers, so halving the bytes of feas is ~2x on both
# (accumulation stays f32 in-kernel).
# ---------------------------------------------------------------------------
def _branch_features(x, conv_ws, bn_params, groups, *, out_dtype=jnp.bfloat16):
    # TODO(synk): grouped 3x3/5x5 convolutions + batchnorm stay in XLA (lax.conv); a bespoke Pallas grouped-conv kernel is out of scope here.
    feas = []
    for i, w in enumerate(conv_ws):
        k = w.shape[-1]
        pad = (k - 1) // 2
        y = lax.conv_general_dilated(
            x, w, window_strides=(1, 1), padding=[(pad, pad), (pad, pad)],
            dimension_numbers=("NCHW", "OIHW", "NCHW"),
            feature_group_count=groups)
        gamma, beta, mean, var = bn_params[i]
        inv = gamma * lax.rsqrt(var + 1e-5)
        y = y * inv[None, :, None, None] + (beta - mean * inv)[None, :, None, None]
        feas.append(jnp.maximum(y, 0.0).astype(out_dtype))
    return jnp.stack(feas, axis=1)                        # (B, M, C, H, W)


# ---------------------------------------------------------------------------
# Full SCKConv forward (Pallas-backed).
# ---------------------------------------------------------------------------
def sckconv_forward(x, params, *, feas_dtype=jnp.bfloat16, out_dtype=None,
                    pool_hw_tile=None, combine_hw_tile=None):
    conv_ws = params["conv_ws"]
    bn_params = params["bn"]
    ca_w1, ca_w2 = params["ca_w1"], params["ca_w2"]       # (M, h, C), (M, C, h)
    w_fc, b_fc = params["w_fc"], params["b_fc"]           # (d, C), (d,)
    w_fcs, b_fcs = params["w_fcs"], params["b_fcs"]       # (M, C, d), (M, C)
    groups = params["groups"]

    B, C, H, W = x.shape
    M = len(conv_ws)
    HW = H * W
    HWp = ((HW + 127) // 128) * 128

    feas = _branch_features(x, conv_ws, bn_params, groups, out_dtype=feas_dtype)
    feas_flat = feas.reshape(B, M, C, HW)
    if HWp != HW:
        # Pad HW to a multiple of 128 so (C, T) tiles satisfy the (8,128)
        # constraint.  Zeros are exact for the sum and (post-ReLU, feas >= 0)
        # for the max; the padded combine lanes are sliced off below.
        feas_flat = jnp.pad(feas_flat, ((0, 0), (0, 0), (0, 0), (0, HWp - HW)))

    # --- Pallas kernel 1: fused streaming avg+max pool for all B*M maps ---
    pooled = fused_avg_max_pool(
        feas_flat.reshape(B * M, C, HWp), HW,
        max_hw_tile=(pool_hw_tile or 8192),
    ).reshape(B, M, C, 2)
    avg, mx = pooled[..., 0], pooled[..., 1]              # (B, M, C) each, f32

    # --- tiny per-branch CBAM MLP, batched in XLA (hoisted out of the grid) ---
    def ca_mlp(v):                                        # v: (B, M, C)
        h = jnp.maximum(jnp.einsum("mhc,bmc->bmh", ca_w1, v), 0.0)
        return jnp.einsum("mch,bmh->bmc", ca_w2, h)
    ca = jax.nn.sigmoid(ca_mlp(avg) + ca_mlp(mx))         # (B, M, C)

    # --- selective-kernel attention (fea_s reuses the Pallas-pooled means:
    #     mean_hw(sum_m fea_m) == sum_m mean_hw(fea_m)) ---
    fea_s = jnp.sum(avg, axis=1)                          # (B, C)
    fea_z = fea_s @ w_fc.T + b_fc                         # (B, d)
    vectors = jnp.einsum("mcd,bd->bmc", w_fcs, fea_z) + b_fcs[None]
    att = jax.nn.softmax(vectors, axis=1)                 # (B, M, C)

    # --- Pallas kernel 2: fea_v = sum_m (ca_m * att_m) * fea_m ---
    weights = ca * att                                    # (B, M, C)
    fea_v = weighted_branch_sum(feas_flat, weights, out_dtype=out_dtype,
                                max_hw_tile=(combine_hw_tile or 8192))
    return fea_v[:, :, :HW].reshape(B, C, H, W)


# ---------------------------------------------------------------------------
# Pure-JAX reference mirroring the PyTorch SCKConv forward (f32 math on the
# same bf16 branch features, so the comparison isolates the kernel path).
# ---------------------------------------------------------------------------
def sckconv_ref(x, params, *, feas_dtype=jnp.bfloat16):
    conv_ws = params["conv_ws"]
    ca_w1, ca_w2 = params["ca_w1"], params["ca_w2"]
    w_fc, b_fc = params["w_fc"], params["b_fc"]
    w_fcs, b_fcs = params["w_fcs"], params["b_fcs"]

    feas = _branch_features(x, conv_ws, params["bn"], params["groups"],
                            out_dtype=feas_dtype).astype(jnp.float32)
    M = feas.shape[1]
    outs = []
    for m in range(M):
        f = feas[:, m]                                    # (B, C, H, W)
        avg = f.mean(axis=(2, 3))
        mx = f.max(axis=(2, 3))

        def fc(v, m=m):
            h = jnp.maximum(v @ ca_w1[m].T, 0.0)
            return h @ ca_w2[m].T

        scale = jax.nn.sigmoid(fc(avg) + fc(mx))[:, :, None, None]
        outs.append(scale * f)
    outs = jnp.stack(outs, axis=1)                        # (B, M, C, H, W)

    fea_U = feas.sum(axis=1)
    fea_s = fea_U.mean(axis=(2, 3))                       # (B, C)
    fea_z = fea_s @ w_fc.T + b_fc
    vectors = jnp.stack([fea_z @ w_fcs[m].T + b_fcs[m] for m in range(M)], axis=1)
    att = jax.nn.softmax(vectors, axis=1)[..., None, None]
    return (outs * att).sum(axis=1)


if __name__ == "__main__":
    # True f32 matmuls so the Pallas path and the reference agree tightly.
    jax.config.update("jax_default_matmul_precision", "highest")

    key = jax.random.PRNGKey(0)
    B, C, H, W = 2, 64, 16, 16          # features=64 so in_planes//16 = 4
    M, G, r, L = 2, 4, 16, 32
    hidden = C // 16
    d = max(C // r, L)                  # = 32

    keys = jax.random.split(key, 16)
    x = jax.random.normal(keys[0], (B, C, H, W), dtype=jnp.float32)

    conv_ws, bn_params = [], []
    for i in range(M):
        k = 3 + 2 * i
        fan_in = (C // G) * k * k
        conv_ws.append(0.5 * jax.random.normal(
            keys[1 + i], (C, C // G, k, k), jnp.float32) / (fan_in ** 0.5))
        gk = jax.random.split(keys[5 + i], 4)
        gamma = 1.0 + 0.1 * jax.random.normal(gk[0], (C,), jnp.float32)
        beta = 0.1 * jax.random.normal(gk[1], (C,), jnp.float32)
        mean = 0.1 * jax.random.normal(gk[2], (C,), jnp.float32)
        var = 1.0 + 0.1 * jnp.abs(jax.random.normal(gk[3], (C,), jnp.float32))
        bn_params.append((gamma, beta, mean, var))

    params = {
        "conv_ws": conv_ws,
        "bn": bn_params,
        "ca_w1": 0.2 * jax.random.normal(keys[8], (M, hidden, C), jnp.float32),
        "ca_w2": 0.2 * jax.random.normal(keys[9], (M, C, hidden), jnp.float32),
        "w_fc": 0.2 * jax.random.normal(keys[10], (d, C), jnp.float32),
        "b_fc": 0.1 * jax.random.normal(keys[11], (d,), jnp.float32),
        "w_fcs": 0.2 * jax.random.normal(keys[12], (M, C, d), jnp.float32),
        "b_fcs": 0.1 * jax.random.normal(keys[13], (M, C), jnp.float32),
        "groups": G,
    }

    # HW = 256; forcing 128-wide tiles exercises the multi-step streaming path.
    out_stream = sckconv_forward(x, params, pool_hw_tile=128, combine_hw_tile=128)
    out_stream = jax.block_until_ready(out_stream)

    # Auto (budget-derived) tiling path: single-step per map at this tiny shape.
    out_auto = sckconv_forward(x, params)
    out_auto = jax.block_until_ready(out_auto)

    ref = sckconv_ref(x, params)
    assert out_stream.shape == (B, C, H, W)
    # Tolerance covers the bf16 feas / bf16 output rounding (f32 accumulation).
    tol = dict(atol=2e-2, rtol=2e-2)
    assert jnp.allclose(out_stream.astype(jnp.float32), ref, **tol), "mismatch (streamed)"
    assert jnp.allclose(out_auto.astype(jnp.float32), ref, **tol), "mismatch (auto tile)"

    print("KERNEL_OK")
</pallas_src>

<mosaic_0001>
module attributes {stable_mosaic.version = 11 : i64} {
  func.func @_pool_kernel(%arg0: i32, %arg1: i32, %arg2: memref<2x64x128xbf16, #tpu.memory_space<vmem>>, %arg3: memref<2x64x2xf32, #tpu.memory_space<vmem>>, %arg4: memref<2x64x128xf32, #tpu.memory_space<vmem>>, %arg5: memref<2x64x128xf32, #tpu.memory_space<vmem>>) attributes {dimension_semantics = [#tpu.dimension_semantics<parallel>, #tpu.dimension_semantics<arbitrary>], iteration_bounds = array<i64: 2, 2>, scalar_prefetch = 0 : i64, scratch_operands = 2 : i64, tpu.core_type = #tpu.core_type<tc>, window_params = [{transform_indices = @transform_0, window_bounds = array<i64: 2, 64, 128>}, {transform_indices = @transform_1, window_bounds = array<i64: 2, 64, 2>}]} {
    %c0_i32 = arith.constant 0 : i32
    %0 = arith.cmpi eq, %arg1, %c0_i32 : i32
    %1 = arith.extui %0 : i1 to i32
    %c0_i32_0 = arith.constant 0 : i32
    %2 = arith.cmpi ne, %1, %c0_i32_0 : i32
    scf.if %2 {
      %cst = arith.constant 0.000000e+00 : f32
      %14 = vector.broadcast %cst : f32 to vector<2x64x128xf32>
      %c0_16 = arith.constant 0 : index
      %c0_17 = arith.constant 0 : index
      %c0_18 = arith.constant 0 : index
      %15 = vector.load %arg4[%c0_16, %c0_17, %c0_18] : memref<2x64x128xf32, #tpu.memory_space<vmem>>, vector<2x64x128xf32>
      tpu.vector_store %arg4[%c0_16, %c0_17, %c0_18], %14 {strides = array<i32>} : memref<2x64x128xf32, #tpu.memory_space<vmem>>, vector<2x64x128xf32>,
      %cst_19 = arith.constant 0xFF800000 : f32
      %16 = vector.broadcast %cst_19 : f32 to vector<2x64x128xf32>
      %c0_20 = arith.constant 0 : index
      %c0_21 = arith.constant 0 : index
      %c0_22 = arith.constant 0 : index
      %17 = vector.load %arg5[%c0_20, %c0_21, %c0_22] : memref<2x64x128xf32, #tpu.memory_space<vmem>>, vector<2x64x128xf32>
      tpu.vector_store %arg5[%c0_20, %c0_21, %c0_22], %16 {strides = array<i32>} : memref<2x64x128xf32, #tpu.memory_space<vmem>>, vector<2x64x128xf32>,
    } else {
    }
    %c0 = arith.constant 0 : index
    %c0_1 = arith.constant 0 : index
    %c0_2 = arith.constant 0 : index
    %3 = vector.load %arg2[%c0, %c0_1, %c0_2] : memref<2x64x128xbf16, #tpu.memory_space<vmem>>, vector<2x64x128xbf16>
    %4 = arith.extf %3 : vector<2x64x128xbf16> to vector<2x64x128xf32>
    %c0_3 = arith.constant 0 : index
    %c0_4 = arith.constant 0 : index
    %c0_5 = arith.constant 0 : index
    %5 = vector.load %arg4[%c0_3, %c0_4, %c0_5] : memref<2x64x128xf32, #tpu.memory_space<vmem>>, vector<2x64x128xf32>
    %6 = arith.addf %5, %4 : vector<2x64x128xf32>
    %c0_6 = arith.constant 0 : index
    %c0_7 = arith.constant 0 : index
    %c0_8 = arith.constant 0 : index
    %7 = vector.load %arg4[%c0_6, %c0_7, %c0_8] : memref<2x64x128xf32, #tpu.memory_space<vmem>>, vector<2x64x128xf32>
    tpu.vector_store %arg4[%c0_6, %c0_7, %c0_8], %6 {strides = array<i32>} : memref<2x64x128xf32, #tpu.memory_space<vmem>>, vector<2x64x128xf32>,
    %c0_9 = arith.constant 0 : index
    %c0_10 = arith.constant 0 : index
    %c0_11 = arith.constant 0 : index
    %8 = vector.load %arg5[%c0_9, %c0_10, %c0_11] : memref<2x64x128xf32, #tpu.memory_space<vmem>>, vector<2x64x128xf32>
    %9 = arith.maximumf %8, %4 : vector<2x64x128xf32>
    %c0_12 = arith.constant 0 : index
    %c0_13 = arith.constant 0 : index
    %c0_14 = arith.constant 0 : index
    %10 = vector.load %arg5[%c0_12, %c0_13, %c0_14] : memref<2x64x128xf32, #tpu.memory_space<vmem>>, vector<2x64x128xf32>
    tpu.vector_store %arg5[%c0_12, %c0_13, %c0_14], %9 {strides = array<i32>} : memref<2x64x128xf32, #tpu.memory_space<vmem>>, vector<2x64x128xf32>,
    %c1_i32 = arith.constant 1 : i32
    %11 = arith.cmpi eq, %arg1, %c1_i32 : i32
    %12 = arith.extui %11 : i1 to i32
    %c0_i32_15 = arith.constant 0 : i32
    %13 = arith.cmpi ne, %12, %c0_i32_15 : i32
    scf.if %13 {
      %c0_16 = arith.constant 0 : index
      %c0_17 = arith.constant 0 : index
      %c0_18 = arith.constant 0 : index
      %14 = vector.load %arg4[%c0_16, %c0_17, %c0_18] : memref<2x64x128xf32, #tpu.memory_space<vmem>>, vector<2x64x128xf32>
      %cst = arith.constant dense<0.000000e+00> : vector<2x64xf32>
      %15 = vector.multi_reduction <add>, %14, %cst [2] : vector<2x64x128xf32> to vector<2x64xf32>
      %16 = vector.shape_cast %15 : vector<2x64xf32> to vector<2x64x1xf32>
      %cst_19 = arith.constant 3.906250e-03 : f32
      %17 = vector.broadcast %cst_19 : f32 to vector<2x64x1xf32>
      %18 = arith.mulf %16, %17 : vector<2x64x1xf32>
      %c0_20 = arith.constant 0 : index
      %c0_21 = arith.constant 0 : index
      %c0_22 = arith.constant 0 : index
      %19 = vector.load %arg5[%c0_20, %c0_21, %c0_22] : memref<2x64x128xf32, #tpu.memory_space<vmem>>, vector<2x64x128xf32>
      %cst_23 = arith.constant dense<0xFF800000> : vector<2x64xf32>
      %20 = vector.multi_reduction <maximumf>, %19, %cst_23 [2] : vector<2x64x128xf32> to vector<2x64xf32>
      %21 = vector.shape_cast %20 : vector<2x64xf32> to vector<2x64x1xf32>
      %22 = tpu.iota {dimensions = array<i32: 2>} : vector<2x64x2xi32>
      %c0_i32_24 = arith.constant 0 : i32
      %23 = vector.broadcast %c0_i32_24 : i32 to vector<2x64x2xi32>
      %24 = arith.cmpi eq, %22, %23 : vector<2x64x2xi32>
      %25 = vector.shape_cast %18 : vector<2x64x1xf32> to vector<2x64x1xf32>
      %26 = vector.broadcast %25 : vector<2x64x1xf32> to vector<2x64x2xf32>
      %27 = vector.shape_cast %21 : vector<2x64x1xf32> to vector<2x64x1xf32>
      %28 = vector.broadcast %27 : vector<2x64x1xf32> to vector<2x64x2xf32>
      %29 = arith.select %24, %26, %28 : vector<2x64x2xi1>, vector<2x64x2xf32>
      %c0_25 = arith.constant 0 : index
      %c0_26 = arith.constant 0 : index
      %c0_27 = arith.constant 0 : index
      %30 = vector.load %arg3[%c0_25, %c0_26, %c0_27] : memref<2x64x2xf32, #tpu.memory_space<vmem>>, vector<2x64x2xf32>
      tpu.vector_store %arg3[%c0_25, %c0_26, %c0_27], %29 {strides = array<i32>} : memref<2x64x2xf32, #tpu.memory_space<vmem>>, vector<2x64x2xf32>,
    } else {
    }
    return
  }
  func.func @transform_0(%arg0: i32, %arg1: i32) -> (i32, i32, i32) {
    %c0_i32 = arith.constant 0 : i32
    %c0_i32_0 = arith.constant 0 : i32
    return %arg0, %c0_i32, %arg1 : i32, i32, i32
  }
  func.func @transform_1(%arg0: i32, %arg1: i32) -> (i32, i32, i32) {
    %c0_i32 = arith.constant 0 : i32
    %c0_i32_0 = arith.constant 0 : i32
    %c0_i32_1 = arith.constant 0 : i32
    return %arg0, %c0_i32, %c0_i32_0 : i32, i32, i32
  }
}

</mosaic_0001>

<llo_original>
// kernel: tpu_custom_call.1
$region0: #{tpu_custom_call.1}
  #allocation0 [shape = 'u32[]', space=smem, size = 0x4, offset = 0x4, fixed_abs, tag = 'smem constant byte address 0x4 - core index']
  #allocation1 [shape = 'u32[144,128]{1,0:T(1,128)}', space=vmem, size = 0x12000, scoped, tag = 'internal scratch']
  #allocation2 [shape = 'f32[2,64,128]{2,1,0:T(8,128)}', space=vmem, size = 0x10000, scoped, tag = 'scratch operand']
  #allocation3 [shape = 'f32[2,64,128]{2,1,0:T(8,128)}', space=vmem, size = 0x10000, scoped, tag = 'scratch operand']
  %s0 = inlined_call_operand.hbm [shape: bf16[4,64,256], index: 0, kind: input, shape index: {}]
  %s1 = inlined_call_operand.vmem [shape: f32[4,64,2], index: 1, kind: output, shape index: {}]
  %s2 = sld [smem:[#allocation0]]
  $region49: #{tpu_custom_call.1} parent=0
    _
  %s4 = ssub.s32 1, %s2
  %s5 = scalar_select 0, %s4, %s2
  $region1: #{tpu_custom_call.1} parent=0
    #allocation4 [shape = 'u8[65536]{0}', space=vmem, size = 0x10000, scoped, tag = 'input window, operand 0']
    #allocation5 [shape = 's32[2]{0}', space=sflag, size = 0x8, scoped, tag = 'scoped memory for tpu_custom_call.1']
    %6 = vsyncpa [#allocation5], 0
    %s7 = scalar_lea.sflag [#allocation5], 1
    %8 = vsyncpa %s7, 0
    loop: start=0, step=1, limit=6
    $region2: #{tpu_custom_call.1} parent=1 // loop_pre_header
      _
    $region3: #{tpu_custom_call.1} parent=1 // loop_header
      %s10 = sphi 0, %s14
      %p11 = scmp.ge.s32.totalorder %s10, 6
      %s17 = sphi 0, %s29
      %s18 = sphi 0, %s25
      %s19 = sphi 0, %s17
      %s20 = sphi 0, %s18
      %s21 = sphi 0, %s19
      %s22 = sphi 0, %s20
      %s34 = sphi 0, %s36
      %s37 = sphi 0, %s34
      %s38 = sphi 0, %s37
      %s54 = sphi 0, %s38
      %s60 = sphi 0, %s62
      %s63 = sphi 0, %s60
      %s64 = sphi 0, %s63
      %s80 = sphi 0, %s64
    $region4: #{tpu_custom_call.1} parent=1 // loop_header_branch
      %13 = sbr.rel (%p11) target = $region8
    $region5: #{tpu_custom_call.1} parent=1 // loop_body
      %s15 = ssub.s32 %s10, 1
      %s16 = ssub.s32 %s10, 2
      %s23 = sadd.s32 1, %s18
      %p24 = scmp.ge.s32.totalorder %s23, 2
      %s25 = scalar_select %p24, 0, %s23
      %s26 = sadd.s32 1, %s17
      %s27 = scalar_select %p24, %s26, %s17
      %p28 = scmp.ge.s32.totalorder %s27, 2
      %s29 = scalar_select %p28, 0, %s27
      %s30 = ssub.s32 %s17, %s29
      %s31 = ssub.s32 %s18, %s25
      %s32 = sor.u32 %s30, %s31
      %p33 = scmp.eq.s32.totalorder %s32, 0
      %s35 = sadd.s32 %s34, 1
      %s36 = scalar_select %p33, %s34, %s35
      %p39 = pneg %p33
      %p40 = scmp.eq.s32.totalorder %s10, 3
      %p41 = por %p39, %p40
      %p42 = scmp.ne.s32.totalorder %s34, %s37
      %p43 = scmp.eq.s32.totalorder %s10, 0
      %p44 = por %p42, %p43
      %p45 = scmp.ne.s32.totalorder %s34, %s37
      %p46 = scmp.eq.s32.totalorder %s15, 3
      %p47 = por %p45, %p46
      %p48 = scmp.ne.s32.totalorder %s37, %s38
      %p49 = scmp.eq.s32.totalorder %s15, 0
      %p50 = por %p48, %p49
      %p51 = scmp.ne.s32.totalorder %s37, %s38
      %p52 = scmp.eq.s32.totalorder %s16, 3
      %p53 = por %p51, %p52
      %p55 = scmp.ne.s32.totalorder %s38, %s54
      %p56 = scmp.eq.s32.totalorder %s16, 0
      %p57 = por %p55, %p56
      %s58 = ssub.s32 %s17, %s29
      %p59 = scmp.eq.s32.totalorder %s58, 0
      %s61 = sadd.s32 %s60, 1
      %s62 = scalar_select %p59, %s60, %s61
      %p65 = pneg %p59
      %p66 = scmp.eq.s32.totalorder %s10, 3
      %p67 = por %p65, %p66
      %p68 = scmp.ne.s32.totalorder %s60, %s63
      %p69 = scmp.eq.s32.totalorder %s10, 0
      %p70 = por %p68, %p69
      %p71 = scmp.ne.s32.totalorder %s60, %s63
      %p72 = scmp.eq.s32.totalorder %s15, 3
      %p73 = por %p71, %p72
      %p74 = scmp.ne.s32.totalorder %s63, %s64
      %p75 = scmp.eq.s32.totalorder %s15, 0
      %p76 = por %p74, %p75
      %p77 = scmp.ne.s32.totalorder %s63, %s64
      %p78 = scmp.eq.s32.totalorder %s16, 3
      %p79 = por %p77, %p78
      %p81 = scmp.ne.s32.totalorder %s64, %s80
      %p82 = scmp.eq.s32.totalorder %s16, 0
      %p83 = por %p81, %p82
      %p84 = scmp.le.s32.totalorder 1, %s10
      %p85 = scmp.lt.s32.totalorder %s10, 5
      %p86 = pnand %p84, %p85
      %p87 = pneg %p86
      // Predicated region
      $region9: #{tpu_custom_call.1} parent=5 // pred_check
        _
      $region10: #{tpu_custom_call.1} parent=5 // pred_check_branch
        %89 = sbr.rel (%p86) target = $region12
      $region11: #{tpu_custom_call.1} parent=5 // pred_region
        %s90 = ssub.s32 %s10, 1
      $region12: #{tpu_custom_call.1} parent=5 // pred_fallthru
        _
      %p91 = scmp.lt.s32.totalorder %s10, 4
      // Predicated region
      $region13: #{tpu_custom_call.1} parent=5 // pred_check
        %p92 = pneg %p91
      $region14: #{tpu_custom_call.1} parent=5 // pred_check_branch
        %94 = sbr.rel (%p92) target = $region16
      $region15: #{tpu_custom_call.1} parent=5 // pred_region
        // Predicated region
        $region17: #{tpu_custom_call.1} parent=15 // pred_check
          %p95 = pneg %p44
        $region18: #{tpu_custom_call.1} parent=15 // pred_check_branch
          %97 = sbr.rel (%p95) target = $region20
        $region19: #{tpu_custom_call.1} parent=15 // pred_region
          %s98 = sand.u32 %s34, 1
          %s99 = scalar_lea.sflag [#allocation5], %s98
          %s100 = sand.u32 %s34, 1
          %s101 = smul.addr %s100, 64
          %s102 = scalar_lea.vmem [#allocation4], %s101
          %s103 = smul.u32 2, %s17
          %s105 = ssub.s32 1024, 1024
          %106 = vsyncadd %s99, %s105
          %s107 = smul.addr %s103, 16
          %s108 = sadd.s32 %s18, %s107
          %s109 = smul.addr %s108, 64
          %s110 = scalar_lea.hbm %s0, %s109
          %s111 = sshll.u32 %s102, 4
          %s112 = int_to_ptr.vmem [resolvable:$true] %s111
          %117 = dma.hbm_to_vmem [thread:$0]  %s110, 1024, %s112, %s99, 128, 64, 4
        $region20: #{tpu_custom_call.1} parent=15 // pred_fallthru
          _
      $region16: #{tpu_custom_call.1} parent=5 // pred_fallthru
        _
      %p118 = scmp.le.s32.totalorder 1, %s10
      %p119 = scmp.lt.s32.totalorder %s10, 5
      %p120 = pnand %p118, %p119
      %p121 = pneg %p120
      // Predicated region
      $region21: #{tpu_custom_call.1} parent=5 // pred_check
        _
      $region22: #{tpu_custom_call.1} parent=5 // pred_check_branch
        %123 = sbr.rel (%p120) target = $region24
      $region23: #{tpu_custom_call.1} parent=5 // pred_region
        %s124 = ssub.s32 %s10, 1
        %s125 = sand.u32 %s37, 1
        %s126 = scalar_lea.sflag [#allocation5], %s125
        %s127 = sand.u32 %s37, 1
        %s128 = smul.addr %s127, 64
        %s129 = scalar_lea.vmem [#allocation4], %s128
        // Predicated region
        $region25: #{tpu_custom_call.1} parent=23 // pred_check
          %p130 = pneg %p50
        $region26: #{tpu_custom_call.1} parent=23 // pred_check_branch
          %132 = sbr.rel (%p130) target = $region28
        $region27: #{tpu_custom_call.1} parent=23 // pred_region
          %133 = dma.done %s126, 1024
        $region28: #{tpu_custom_call.1} parent=23 // pred_fallthru
          _
        %s134 = sand.u32 %s37, 1
        %s135 = scalar_lea.sflag [#allocation5], %s134
        %s136 = sand.u32 %s37, 1
        %s137 = smul.addr %s136, 64
        %s138 = scalar_lea.vmem [#allocation4], %s137
        %p139 = pneg %p50
        %p140 = pneg %p47
        %p141 = pneg %p76
        %p142 = pneg %p73
        %s143 = smul.u32 2, %s19
        %p144 = scmp.lt.s32.totalorder %s143, 3
        %s145 = scalar_select %p144, %s143, 3
        %s146 = smul.addr %s145, 8
        %s147 = smul.addr %s146, 8
        %s148 = scalar_lea.vmem %s1, %s147
        %s149 = smul.u32 2, %s19
        %s150 = smul.u32 2, %s19
        %p151 = scmp.lt.s32.totalorder %s150, 3
        %s152 = scalar_select %p151, %s150, 3
        %s153 = smul.addr %s152, 8
        %s154 = smul.addr %s153, 8
        %s155 = scalar_lea.vmem %s1, %s154
        %s156 = smul.u32 2, %s19
        %p157 = scmp.eq.s32.totalorder %s20, 0
        // Predicated region
        $region29: #{tpu_custom_call.1} parent=23 // pred_check
          %p158 = pneg %p157
        $region30: #{tpu_custom_call.1} parent=23 // pred_check_branch
          %160 = sbr.rel (%p158) target = $region32
        $region31: #{tpu_custom_call.1} parent=23 // pred_region
          %161 = vst [vmem:[#allocation2] sm:$0xff] 0.0
          %162 = vst [vmem:[#allocation2 + $0x8] sm:$0xff] 0.0
          %163 = vst [vmem:[#allocation2 + $0x10] sm:$0xff] 0.0
          %164 = vst [vmem:[#allocation2 + $0x18] sm:$0xff] 0.0
          %165 = vst [vmem:[#allocation2 + $0x20] sm:$0xff] 0.0
          %166 = vst [vmem:[#allocation2 + $0x28] sm:$0xff] 0.0
          %167 = vst [vmem:[#allocation2 + $0x30] sm:$0xff] 0.0
          %168 = vst [vmem:[#allocation2 + $0x38] sm:$0xff] 0.0
          %169 = vst [vmem:[#allocation2 + $0x40] sm:$0xff] 0.0
          %170 = vst [vmem:[#allocation2 + $0x48] sm:$0xff] 0.0
          %171 = vst [vmem:[#allocation2 + $0x50] sm:$0xff] 0.0
          %172 = vst [vmem:[#allocation2 + $0x58] sm:$0xff] 0.0
          %173 = vst [vmem:[#allocation2 + $0x60] sm:$0xff] 0.0
          %174 = vst [vmem:[#allocation2 + $0x68] sm:$0xff] 0.0
          %175 = vst [vmem:[#allocation2 + $0x70] sm:$0xff] 0.0
          %176 = vst [vmem:[#allocation2 + $0x78] sm:$0xff] 0.0
          %177 = vst [vmem:[#allocation3] sm:$0xff] -inf
          %178 = vst [vmem:[#allocation3 + $0x8] sm:$0xff] -inf
          %179 = vst [vmem:[#allocation3 + $0x10] sm:$0xff] -inf
          %180 = vst [vmem:[#allocation3 + $0x18] sm:$0xff] -inf
          %181 = vst [vmem:[#allocation3 + $0x20] sm:$0xff] -inf
          %182 = vst [vmem:[#allocation3 + $0x28] sm:$0xff] -inf
          %183 = vst [vmem:[#allocation3 + $0x30] sm:$0xff] -inf
          %184 = vst [vmem:[#allocation3 + $0x38] sm:$0xff] -inf
          %185 = vst [vmem:[#allocation3 + $0x40] sm:$0xff] -inf
          %186 = vst [vmem:[#allocation3 + $0x48] sm:$0xff] -inf
          %187 = vst [vmem:[#allocation3 + $0x50] sm:$0xff] -inf
          %188 = vst [vmem:[#allocation3 + $0x58] sm:$0xff] -inf
          %189 = vst [vmem:[#allocation3 + $0x60] sm:$0xff] -inf
          %190 = vst [vmem:[#allocation3 + $0x68] sm:$0xff] -inf
          %191 = vst [vmem:[#allocation3 + $0x70] sm:$0xff] -inf
          %192 = vst [vmem:[#allocation3 + $0x78] sm:$0xff] -inf
        $region32: #{tpu_custom_call.1} parent=23 // pred_fallthru
          _
        %v193 = vld [vmem:[%s129] sm:$0xf]
        %v194 = vld [vmem:[%s129 + $0x4] sm:$0xf]
        %v195 = vld [vmem:[%s129 + $0x8] sm:$0xf]
        %v196 = vld [vmem:[%s129 + $0xc] sm:$0xf]
        %v197 = vld [vmem:[%s129 + $0x10] sm:$0xf]
        %v198 = vld [vmem:[%s129 + $0x14] sm:$0xf]
        %v199 = vld [vmem:[%s129 + $0x18] sm:$0xf]
        %v200 = vld [vmem:[%s129 + $0x1c] sm:$0xf]
        %v201 = vld [vmem:[%s129 + $0x20] sm:$0xf]
        %v202 = vld [vmem:[%s129 + $0x24] sm:$0xf]
        %v203 = vld [vmem:[%s129 + $0x28] sm:$0xf]
        %v204 = vld [vmem:[%s129 + $0x2c] sm:$0xf]
        %v205 = vld [vmem:[%s129 + $0x30] sm:$0xf]
        %v206 = vld [vmem:[%s129 + $0x34] sm:$0xf]
        %v207 = vld [vmem:[%s129 + $0x38] sm:$0xf]
        %v208 = vld [vmem:[%s129 + $0x3c] sm:$0xf]
        %v209 = vunpack.c.l.bf16 %v193
        %v210 = vunpack.c.l.bf16 %v194
        %v211 = vunpack.c.l.bf16 %v195
        %v212 = vunpack.c.l.bf16 %v196
        %v213 = vunpack.c.l.bf16 %v197
        %v214 = vunpack.c.l.bf16 %v198
        %v215 = vunpack.c.l.bf16 %v199
        %v216 = vunpack.c.l.bf16 %v200
        %v217 = vunpack.c.l.bf16 %v201
        %v218 = vunpack.c.l.bf16 %v202
        %v219 = vunpack.c.l.bf16 %v203
        %v220 = vunpack.c.l.bf16 %v204
        %v221 = vunpack.c.l.bf16 %v205
        %v222 = vunpack.c.l.bf16 %v206
        %v223 = vunpack.c.l.bf16 %v207
        %v224 = vunpack.c.l.bf16 %v208
        %v225 = vld [vmem:[#allocation2] sm:$0xff]
        %v226 = vld [vmem:[#allocation2 + $0x8] sm:$0xff]
        %v227 = vld [vmem:[#allocation2 + $0x10] sm:$0xff]
        %v228 = vld [vmem:[#allocation2 + $0x18] sm:$0xff]
        %v229 = vld [vmem:[#allocation2 + $0x20] sm:$0xff]
        %v230 = vld [vmem:[#allocation2 + $0x28] sm:$0xff]
        %v231 = vld [vmem:[#allocation2 + $0x30] sm:$0xff]
        %v232 = vld [vmem:[#allocation2 + $0x38] sm:$0xff]
        %v233 = vld [vmem:[#allocation2 + $0x40] sm:$0xff]
        %v234 = vld [vmem:[#allocation2 + $0x48] sm:$0xff]
        %v235 = vld [vmem:[#allocation2 + $0x50] sm:$0xff]
        %v236 = vld [vmem:[#allocation2 + $0x58] sm:$0xff]
        %v237 = vld [vmem:[#allocation2 + $0x60] sm:$0xff]
        %v238 = vld [vmem:[#allocation2 + $0x68] sm:$0xff]
        %v239 = vld [vmem:[#allocation2 + $0x70] sm:$0xff]
        %v240 = vld [vmem:[#allocation2 + $0x78] sm:$0xff]
        %v241 = vadd.f32 %v225, %v209
        %v242 = vadd.f32 %v226, %v210
        %v243 = vadd.f32 %v227, %v211
        %v244 = vadd.f32 %v228, %v212
        %v245 = vadd.f32 %v229, %v213
        %v246 = vadd.f32 %v230, %v214
        %v247 = vadd.f32 %v231, %v215
        %v248 = vadd.f32 %v232, %v216
        %v249 = vadd.f32 %v233, %v217
        %v250 = vadd.f32 %v234, %v218
        %v251 = vadd.f32 %v235, %v219
        %v252 = vadd.f32 %v236, %v220
        %v253 = vadd.f32 %v237, %v221
        %v254 = vadd.f32 %v238, %v222
        %v255 = vadd.f32 %v239, %v223
        %v256 = vadd.f32 %v240, %v224
        %257 = vst [vmem:[#allocation2] sm:$0xff] %v241
        %258 = vst [vmem:[#allocation2 + $0x8] sm:$0xff] %v242
        %259 = vst [vmem:[#allocation2 + $0x10] sm:$0xff] %v243
        %260 = vst [vmem:[#allocation2 + $0x18] sm:$0xff] %v244
        %261 = vst [vmem:[#allocation2 + $0x20] sm:$0xff] %v245
        %262 = vst [vmem:[#allocation2 + $0x28] sm:$0xff] %v246
        %263 = vst [vmem:[#allocation2 + $0x30] sm:$0xff] %v247
        %264 = vst [vmem:[#allocation2 + $0x38] sm:$0xff] %v248
        %265 = vst [vmem:[#allocation2 + $0x40] sm:$0xff] %v249
        %266 = vst [vmem:[#allocation2 + $0x48] sm:$0xff] %v250
        %267 = vst [vmem:[#allocation2 + $0x50] sm:$0xff] %v251
        %268 = vst [vmem:[#allocation2 + $0x58] sm:$0xff] %v252
        %269 = vst [vmem:[#allocation2 + $0x60] sm:$0xff] %v253
        %270 = vst [vmem:[#allocation2 + $0x68] sm:$0xff] %v254
        %271 = vst [vmem:[#allocation2 + $0x70] sm:$0xff] %v255
        %272 = vst [vmem:[#allocation2 + $0x78] sm:$0xff] %v256
        %v273 = vld [vmem:[#allocation3] sm:$0xff]
        %v274 = vld [vmem:[#allocation3 + $0x8] sm:$0xff]
        %v275 = vld [vmem:[#allocation3 + $0x10] sm:$0xff]
        %v276 = vld [vmem:[#allocation3 + $0x18] sm:$0xff]
        %v277 = vld [vmem:[#allocation3 + $0x20] sm:$0xff]
        %v278 = vld [vmem:[#allocation3 + $0x28] sm:$0xff]
        %v279 = vld [vmem:[#allocation3 + $0x30] sm:$0xff]
        %v280 = vld [vmem:[#allocation3 + $0x38] sm:$0xff]
        %v281 = vld [vmem:[#allocation3 + $0x40] sm:$0xff]
        %v282 = vld [vmem:[#allocation3 + $0x48] sm:$0xff]
        %v283 = vld [vmem:[#allocation3 + $0x50] sm:$0xff]
        %v284 = vld [vmem:[#allocation3 + $0x58] sm:$0xff]
        %v285 = vld [vmem:[#allocation3 + $0x60] sm:$0xff]
        %v286 = vld [vmem:[#allocation3 + $0x68] sm:$0xff]
        %v287 = vld [vmem:[#allocation3 + $0x70] sm:$0xff]
        %v288 = vld [vmem:[#allocation3 + $0x78] sm:$0xff]
        %v289 = vmax.f32 %v273, %v209
        %v290 = vmax.f32 %v274, %v210
        %v291 = vmax.f32 %v275, %v211
        %v292 = vmax.f32 %v276, %v212
        %v293 = vmax.f32 %v277, %v213
        %v294 = vmax.f32 %v278, %v214
        %v295 = vmax.f32 %v279, %v215
        %v296 = vmax.f32 %v280, %v216
        %v297 = vmax.f32 %v281, %v217
        %v298 = vmax.f32 %v282, %v218
        %v299 = vmax.f32 %v283, %v219
        %v300 = vmax.f32 %v284, %v220
        %v301 = vmax.f32 %v285, %v221
        %v302 = vmax.f32 %v286, %v222
        %v303 = vmax.f32 %v287, %v223
        %v304 = vmax.f32 %v288, %v224
        %305 = vst [vmem:[#allocation3] sm:$0xff] %v289
        %306 = vst [vmem:[#allocation3 + $0x8] sm:$0xff] %v290
        %307 = vst [vmem:[#allocation3 + $0x10] sm:$0xff] %v291
        %308 = vst [vmem:[#allocation3 + $0x18] sm:$0xff] %v292
        %309 = vst [vmem:[#allocation3 + $0x20] sm:$0xff] %v293
        %310 = vst [vmem:[#allocation3 + $0x28] sm:$0xff] %v294
        %311 = vst [vmem:[#allocation3 + $0x30] sm:$0xff] %v295
        %312 = vst [vmem:[#allocation3 + $0x38] sm:$0xff] %v296
        %313 = vst [vmem:[#allocation3 + $0x40] sm:$0xff] %v297
        %314 = vst [vmem:[#allocation3 + $0x48] sm:$0xff] %v298
        %315 = vst [vmem:[#allocation3 + $0x50] sm:$0xff] %v299
        %316 = vst [vmem:[#allocation3 + $0x58] sm:$0xff] %v300
        %317 = vst [vmem:[#allocation3 + $0x60] sm:$0xff] %v301
        %318 = vst [vmem:[#allocation3 + $0x68] sm:$0xff] %v302
        %319 = vst [vmem:[#allocation3 + $0x70] sm:$0xff] %v303
        %320 = vst [vmem:[#allocation3 + $0x78] sm:$0xff] %v304
        %p321 = scmp.eq.s32.totalorder %s20, 1
        // Predicated region
        $region33: #{tpu_custom_call.1} parent=23 // pred_check
          %p322 = pneg %p321
        $region34: #{tpu_custom_call.1} parent=23 // pred_check_branch
          %324 = sbr.rel (%p322) target = $region36
        $region35: #{tpu_custom_call.1} parent=23 // pred_region
          %v325 = vld [vmem:[#allocation2] sm:$0xff]
          %v326 = vld [vmem:[#allocation2 + $0x8] sm:$0xff]
          %v327 = vld [vmem:[#allocation2 + $0x10] sm:$0xff]
          %v328 = vld [vmem:[#allocation2 + $0x18] sm:$0xff]
          %v329 = vld [vmem:[#allocation2 + $0x20] sm:$0xff]
          %v330 = vld [vmem:[#allocation2 + $0x28] sm:$0xff]
          %v331 = vld [vmem:[#allocation2 + $0x30] sm:$0xff]
          %v332 = vld [vmem:[#allocation2 + $0x38] sm:$0xff]
          %v333 = vld [vmem:[#allocation2 + $0x40] sm:$0xff]
          %v334 = vld [vmem:[#allocation2 + $0x48] sm:$0xff]
          %v335 = vld [vmem:[#allocation2 + $0x50] sm:$0xff]
          %v336 = vld [vmem:[#allocation2 + $0x58] sm:$0xff]
          %v337 = vld [vmem:[#allocation2 + $0x60] sm:$0xff]
          %v338 = vld [vmem:[#allocation2 + $0x68] sm:$0xff]
          %v339 = vld [vmem:[#allocation2 + $0x70] sm:$0xff]
          %v340 = vld [vmem:[#allocation2 + $0x78] sm:$0xff]
          %341 = vadd.xlane.f32.xlu0 %v325
          %v342 = vpop.xlane.xlu0 %341
          %343 = vadd.xlane.f32.xlu0 %v326
          %v344 = vpop.xlane.xlu0 %343
          %345 = vadd.xlane.f32.xlu0 %v327
          %v346 = vpop.xlane.xlu0 %345
          %347 = vadd.xlane.f32.xlu0 %v328
          %v348 = vpop.xlane.xlu0 %347
          %349 = vadd.xlane.f32.xlu0 %v329
          %v350 = vpop.xlane.xlu0 %349
          %351 = vadd.xlane.f32.xlu0 %v330
          %v352 = vpop.xlane.xlu0 %351
          %353 = vadd.xlane.f32.xlu0 %v331
          %v354 = vpop.xlane.xlu0 %353
          %355 = vadd.xlane.f32.xlu0 %v332
          %v356 = vpop.xlane.xlu0 %355
          %357 = vadd.xlane.f32.xlu0 %v333
          %v358 = vpop.xlane.xlu0 %357
          %359 = vadd.xlane.f32.xlu0 %v334
          %v360 = vpop.xlane.xlu0 %359
          %361 = vadd.xlane.f32.xlu0 %v335
          %v362 = vpop.xlane.xlu0 %361
          %363 = vadd.xlane.f32.xlu0 %v336
          %v364 = vpop.xlane.xlu0 %363
          %365 = vadd.xlane.f32.xlu0 %v337
          %v366 = vpop.xlane.xlu0 %365
          %367 = vadd.xlane.f32.xlu0 %v338
          %v368 = vpop.xlane.xlu0 %367
          %369 = vadd.xlane.f32.xlu0 %v339
          %v370 = vpop.xlane.xlu0 %369
          %371 = vadd.xlane.f32.xlu0 %v340
          %v372 = vpop.xlane.xlu0 %371
          %v373 = vmul.f32 %v342, 0.00390625
          %v374 = vmul.f32 %v344, 0.00390625
          %v375 = vmul.f32 %v346, 0.00390625
          %v376 = vmul.f32 %v348, 0.00390625
          %v377 = vmul.f32 %v350, 0.00390625
          %v378 = vmul.f32 %v352, 0.00390625
          %v379 = vmul.f32 %v354, 0.00390625
          %v380 = vmul.f32 %v356, 0.00390625
          %v381 = vmul.f32 %v358, 0.00390625
          %v382 = vmul.f32 %v360, 0.00390625
          %v383 = vmul.f32 %v362, 0.00390625
          %v384 = vmul.f32 %v364, 0.00390625
          %v385 = vmul.f32 %v366, 0.00390625
          %v386 = vmul.f32 %v368, 0.00390625
          %v387 = vmul.f32 %v370, 0.00390625
          %v388 = vmul.f32 %v372, 0.00390625
          %v389 = vld [vmem:[#allocation3] sm:$0xff]
          %v390 = vld [vmem:[#allocation3 + $0x8] sm:$0xff]
          %v391 = vld [vmem:[#allocation3 + $0x10] sm:$0xff]
          %v392 = vld [vmem:[#allocation3 + $0x18] sm:$0xff]
          %v393 = vld [vmem:[#allocation3 + $0x20] sm:$0xff]
          %v394 = vld [vmem:[#allocation3 + $0x28] sm:$0xff]
          %v395 = vld [vmem:[#allocation3 + $0x30] sm:$0xff]
          %v396 = vld [vmem:[#allocation3 + $0x38] sm:$0xff]
          %v397 = vld [vmem:[#allocation3 + $0x40] sm:$0xff]
          %v398 = vld [vmem:[#allocation3 + $0x48] sm:$0xff]
          %v399 = vld [vmem:[#allocation3 + $0x50] sm:$0xff]
          %v400 = vld [vmem:[#allocation3 + $0x58] sm:$0xff]
          %v401 = vld [vmem:[#allocation3 + $0x60] sm:$0xff]
          %v402 = vld [vmem:[#allocation3 + $0x68] sm:$0xff]
          %v403 = vld [vmem:[#allocation3 + $0x70] sm:$0xff]
          %v404 = vld [vmem:[#allocation3 + $0x78] sm:$0xff]
          %405 = vmax.xlane.f32.xlu0 %v389
          %v406 = vpop.xlane.xlu0 %405
          %407 = vmax.xlane.f32.xlu0 %v390
          %v408 = vpop.xlane.xlu0 %407
          %409 = vmax.xlane.f32.xlu0 %v391
          %v410 = vpop.xlane.xlu0 %409
          %411 = vmax.xlane.f32.xlu0 %v392
          %v412 = vpop.xlane.xlu0 %411
          %413 = vmax.xlane.f32.xlu0 %v393
          %v414 = vpop.xlane.xlu0 %413
          %415 = vmax.xlane.f32.xlu0 %v394
          %v416 = vpop.xlane.xlu0 %415
          %417 = vmax.xlane.f32.xlu0 %v395
          %v418 = vpop.xlane.xlu0 %417
          %419 = vmax.xlane.f32.xlu0 %v396
          %v420 = vpop.xlane.xlu0 %419
          %421 = vmax.xlane.f32.xlu0 %v397
          %v422 = vpop.xlane.xlu0 %421
          %423 = vmax.xlane.f32.xlu0 %v398
          %v424 = vpop.xlane.xlu0 %423
          %425 = vmax.xlane.f32.xlu0 %v399
          %v426 = vpop.xlane.xlu0 %425
          %427 = vmax.xlane.f32.xlu0 %v400
          %v428 = vpop.xlane.xlu0 %427
          %429 = vmax.xlane.f32.xlu0 %v401
          %v430 = vpop.xlane.xlu0 %429
          %431 = vmax.xlane.f32.xlu0 %v402
          %v432 = vpop.xlane.xlu0 %431
          %433 = vmax.xlane.f32.xlu0 %v403
          %v434 = vpop.xlane.xlu0 %433
          %435 = vmax.xlane.f32.xlu0 %v404
          %v436 = vpop.xlane.xlu0 %435
          %v437 = vlaneseq
          %v438 = vand.u32 %v437, 127
          %vm439 = vcmp.eq.s32.totalorder %v438, 0
          %v440 = vsel %vm439, %v373, %v406
          %v441 = vsel %vm439, %v374, %v408
          %v442 = vsel %vm439, %v375, %v410
          %v443 = vsel %vm439, %v376, %v412
          %v444 = vsel %vm439, %v377, %v414
          %v445 = vsel %vm439, %v378, %v416
          %v446 = vsel %vm439, %v379, %v418
          %v447 = vsel %vm439, %v380, %v420
          %v448 = vsel %vm439, %v381, %v422
          %v449 = vsel %vm439, %v382, %v424
          %v450 = vsel %vm439, %v383, %v426
          %v451 = vsel %vm439, %v384, %v428
          %v452 = vsel %vm439, %v385, %v430
          %v453 = vsel %vm439, %v386, %v432
          %v454 = vsel %vm439, %v387, %v434
          %v455 = vsel %vm439, %v388, %v436
          %vm456 = vcmask 15360
          %457 = vst.msk [vmem:[%s155] sm:$0xff] %vm456, %v440
          %458 = vst.msk [vmem:[%s155 + $0x8] sm:$0xff] %vm456, %v441
          %459 = vst.msk [vmem:[%s155 + $0x10] sm:$0xff] %vm456, %v442
          %460 = vst.msk [vmem:[%s155 + $0x18] sm:$0xff] %vm456, %v443
          %461 = vst.msk [vmem:[%s155 + $0x20] sm:$0xff] %vm456, %v444
          %462 = vst.msk [vmem:[%s155 + $0x28] sm:$0xff] %vm456, %v445
          %463 = vst.msk [vmem:[%s155 + $0x30] sm:$0xff] %vm456, %v446
          %464 = vst.msk [vmem:[%s155 + $0x38] sm:$0xff] %vm456, %v447
          %465 = vst.msk [vmem:[%s155 + $0x40] sm:$0xff] %vm456, %v448
          %466 = vst.msk [vmem:[%s155 + $0x48] sm:$0xff] %vm456, %v449
          %467 = vst.msk [vmem:[%s155 + $0x50] sm:$0xff] %vm456, %v450
          %468 = vst.msk [vmem:[%s155 + $0x58] sm:$0xff] %vm456, %v451
          %469 = vst.msk [vmem:[%s155 + $0x60] sm:$0xff] %vm456, %v452
          %470 = vst.msk [vmem:[%s155 + $0x68] sm:$0xff] %vm456, %v453
          %471 = vst.msk [vmem:[%s155 + $0x70] sm:$0xff] %vm456, %v454
          %472 = vst.msk [vmem:[%s155 + $0x78] sm:$0xff] %vm456, %v455
        $region36: #{tpu_custom_call.1} parent=23 // pred_fallthru
          _
        %s473 = smul.u32 2, %s19
        %p474 = scmp.lt.s32.totalorder %s473, 3
        %s475 = scalar_select %p474, %s473, 3
        %s476 = smul.addr %s475, 8
        %s477 = smul.addr %s476, 8
        %s478 = scalar_lea.vmem %s1, %s477
        // Predicated region
        $region37: #{tpu_custom_call.1} parent=23 // pred_check
          %p479 = pneg %p73
        $region38: #{tpu_custom_call.1} parent=23 // pred_check_branch
          %481 = sbr.rel (%p479) target = $region40
        $region39: #{tpu_custom_call.1} parent=23 // pred_region
          %s482 = smul.u32 2, %s19
        $region40: #{tpu_custom_call.1} parent=23 // pred_fallthru
          _
      $region24: #{tpu_custom_call.1} parent=5 // pred_fallthru
        _
      %p483 = scmp.le.s32.totalorder 2, %s10
      // Predicated region
      $region41: #{tpu_custom_call.1} parent=5 // pred_check
        %p484 = pneg %p483
      $region42: #{tpu_custom_call.1} parent=5 // pred_check_branch
        %486 = sbr.rel (%p484) target = $region44
      $region43: #{tpu_custom_call.1} parent=5 // pred_region
        %s487 = ssub.s32 %s10, 2
        // Predicated region
        $region45: #{tpu_custom_call.1} parent=43 // pred_check
          %p488 = pneg %p79
        $region46: #{tpu_custom_call.1} parent=43 // pred_check_branch
          %490 = sbr.rel (%p488) target = $region48
        $region47: #{tpu_custom_call.1} parent=43 // pred_region
          %s491 = smul.u32 2, %s21
          %p492 = scmp.lt.s32.totalorder %s491, 3
          %s493 = scalar_select %p492, %s491, 3
          %s494 = smul.addr %s493, 8
          %s495 = smul.addr %s494, 8
          %s496 = scalar_lea.vmem %s1, %s495
        $region48: #{tpu_custom_call.1} parent=43 // pred_fallthru
          _
      $region44: #{tpu_custom_call.1} parent=5 // pred_fallthru
        _
    $region6: #{tpu_custom_call.1} parent=1 // loop_footer
      %s14 = sadd.s32 1, %s10
    $region7: #{tpu_custom_call.1} parent=1 // loop_footer_branch
      %9 = sbr.rel target = $region3
    $region8: #{tpu_custom_call.1} parent=1 // loop_exit
      _
    %497 = vsyncpa [#allocation5], 1
    %s498 = scalar_lea.sflag [#allocation5], 1
    %499 = vsyncpa %s498, 1

</llo_original>
